<compile_context>
chip_gen: v6e
topology: v6e:2x2x1
jax: 0.10.0
libtpu: 0.0.40
codegen_flags: <defaults>
</compile_context>

<pallas_src>
import functools

import jax
import jax.numpy as jnp
import numpy as np
from jax import lax
from jax.experimental import pallas as pl
from jax.experimental.pallas import tpu as pltpu

_VMEM_LIMIT = 64 * 1024 * 1024  # per-generation budget; keep <= ~56MiB on v7x


def _round_up(x, m):
    return (x + m - 1) // m * m


# -----------------------------------------------------------------------------
# Kernel 1: alpha = sigmoid(proj(relu(LayerNorm(conv1d(eouts)))))
# grid=(B,): one batch element per program.
# -----------------------------------------------------------------------------
def _alpha_kernel(xpad_ref, w_ref, cb_ref, g_ref, b_ref, pw_ref, pb_ref,
                  alpha_ref, *, T, W, eps, mxu_dtype):
    x = xpad_ref[0]                                       # [T + W - 1, D]
    # Fused conv1d: one [T, W*D] @ [W*D, D] MXU matmul (operands in mxu_dtype,
    # f32 accumulation). LayerNorm and everything after stays in f32.
    xw = jnp.concatenate(
        [x[k:k + T, :].astype(mxu_dtype) for k in range(W)], axis=-1)
    acc = jnp.dot(xw, w_ref[...], preferred_element_type=jnp.float32)
    acc = acc + cb_ref[...]                               # conv bias [1, D]
    mean = jnp.mean(acc, axis=-1, keepdims=True)
    var = jnp.mean(jnp.square(acc - mean), axis=-1, keepdims=True)
    h = (acc - mean) * lax.rsqrt(var + eps) * g_ref[...] + b_ref[...]
    h = jnp.maximum(h, 0.0)                               # ReLU
    # Lane-dense projection on the MXU: [1,D] contracted with [T,D] over D -> [1,T].
    logit = lax.dot_general(pw_ref[...], h, (((1,), (1,)), ((), ())),
                            preferred_element_type=jnp.float32) + pb_ref[...]
    alpha_ref[0, :, :] = jax.nn.sigmoid(logit)            # single lane-dense store


def cif_alpha(eouts, params, window, eps=1e-12, mxu_dtype=jnp.bfloat16):
    # mxu_dtype=bf16 gives ~2-3x MXU throughput on v6e/v7x and halves xw / w_flat VMEM.
    # Use jnp.float32 to reproduce the f32 reference bit-for-bit.
    B, T, D = eouts.shape
    pad = (window - 1) // 2
    Tp = T + 2 * pad
    xpad = jnp.pad(eouts, ((0, 0), (pad, pad), (0, 0))).astype(jnp.float32)
    w_kio = jnp.transpose(params["conv_w"], (2, 1, 0))    # [W, D_in, D_out]
    w_flat = w_kio.reshape(window * D, D).astype(mxu_dtype)
    cb = params["conv_b"].reshape(1, D).astype(jnp.float32)
    g = params["ln_gamma"].reshape(1, D).astype(jnp.float32)
    b = params["ln_beta"].reshape(1, D).astype(jnp.float32)
    pw = params["proj_w"].reshape(1, D).astype(jnp.float32)
    pb = params["proj_b"].reshape(1, 1).astype(jnp.float32)

    alpha3 = pl.pallas_call(
        functools.partial(_alpha_kernel, T=T, W=window, eps=eps,
                          mxu_dtype=mxu_dtype),
        out_shape=jax.ShapeDtypeStruct((B, 1, T), jnp.float32),
        grid=(B,),
        in_specs=[
            pl.BlockSpec((1, Tp, D), lambda i: (i, 0, 0)),
            pl.BlockSpec((window * D, D), lambda i: (0, 0)),
            pl.BlockSpec((1, D), lambda i: (0, 0)),
            pl.BlockSpec((1, D), lambda i: (0, 0)),
            pl.BlockSpec((1, D), lambda i: (0, 0)),
            pl.BlockSpec((1, D), lambda i: (0, 0)),
            pl.BlockSpec((1, 1), lambda i: (0, 0)),
        ],
        out_specs=pl.BlockSpec((1, 1, T), lambda i: (i, 0, 0)),
        compiler_params=pltpu.CompilerParams(
            dimension_semantics=("parallel",),
            vmem_limit_bytes=_VMEM_LIMIT),
    )(xpad, w_flat, cb, g, b, pw, pb)
    return alpha3[:, 0, :]                                # [B, T]


# -----------------------------------------------------------------------------
# Kernel 2: integrate-and-fire recurrence, streamed over T chunks.
# Vectorized over batch; scalar SMEM mirror only for the rare cv scatter.
# -----------------------------------------------------------------------------
def _cif_kernel(anorm_sm, elens_sm, ylens_sm, eouts_ref, anormv_ref,
                elensv_ref, ylensv_ref, cv_ref, aws_ref,
                state_ref, accv_ref, ntokv_ref, aacc_sm, ntok_sm,
                *, beta, tile_t, B):
    t = pl.program_id(0)
    Lpad = aws_ref.shape[2]

    @pl.when(t == 0)
    def _init():
        cv_ref[...] = jnp.zeros_like(cv_ref)
        state_ref[...] = jnp.zeros_like(state_ref)
        accv_ref[...] = jnp.zeros_like(accv_ref)
        ntokv_ref[...] = jnp.zeros_like(ntokv_ref)
        for b in range(B):
            aacc_sm[b] = jnp.float32(0.0)
            ntok_sm[b] = jnp.int32(0)

    # hoisted per-chunk constants
    iota_l = lax.broadcasted_iota(jnp.int32, (1, Lpad), 1)
    el_v = elensv_ref[...]                                  # [B, 1] i32
    yl_v = ylensv_ref[...]                                  # [B, 1] i32

    def step(jj, carry):
        j = t * tile_t + jj                                 # global timestep

        # -------- vector loads (one per step) --------
        e = eouts_ref[pl.ds(jj, 1), :, :][0].astype(jnp.float32)   # [B, D]
        a_v = anormv_ref[pl.ds(jj, 1), :, :][0]                    # [B, 1]
        state_old = state_ref[...]                                 # [B, D]
        acc_old = accv_ref[...]                                    # [B, 1]
        ntok_old = ntokv_ref[...]                                  # [B, 1] i32

        new_v = acc_old + a_v
        fast_v = jnp.max(new_v) < beta                     # cross-batch coupling
        live_v = jnp.logical_and(j <= el_v - 1, ntok_old < yl_v)
        ge_v = new_v >= beta
        fire_v = jnp.logical_and(jnp.logical_not(fast_v),
                                 jnp.logical_and(live_v, ge_v))
        accm_v = jnp.logical_or(fast_v,
                                jnp.logical_and(live_v, jnp.logical_not(ge_v)))
        ak1_v = 1.0 - acc_old
        ak2_v = a_v - ak1_v

        # -------- scalar SMEM mirror: only feeds the rare cv scatter --------
        prev_s, new_s, a_s = [], [], []
        fast_s = None
        for b in range(B):
            pb_ = aacc_sm[b]
            ab_ = anorm_sm[b, j]
            nb_ = pb_ + ab_
            prev_s.append(pb_)
            a_s.append(ab_)
            new_s.append(nb_)
            c = nb_ < beta
            fast_s = c if fast_s is None else jnp.logical_and(fast_s, c)
            aacc_sm[b] = nb_                               # default (non-fire) update

        @pl.when(jnp.logical_not(fast_s))
        def _slow():
            for b in range(B):
                live_b = jnp.logical_and(j <= elens_sm[b] - 1,
                                         ntok_sm[b] < ylens_sm[b])
                fire_b = jnp.logical_and(live_b, new_s[b] >= beta)

                @pl.when(fire_b)
                def _fire(b=b):
                    ak1_b = 1.0 - prev_s[b]
                    ak2_b = a_s[b] - ak1_b
                    nt = ntok_sm[b]
                    cv_ref[b, pl.ds(nt, 1), :] = (state_old[b:b + 1, :]
                                                  + ak1_b * e[b:b + 1, :])
                    aacc_sm[b] = ak2_b
                    ntok_sm[b] = nt + 1

        # -------- branch-free vector updates --------
        c_e = jnp.where(fire_v, ak2_v, jnp.where(accm_v, a_v, 0.0))   # coeff of e
        keep = jnp.where(fire_v, 0.0, 1.0)                            # coeff of state
        state_ref[...] = keep * state_old + c_e * e

        v_n = jnp.where(fire_v, ak1_v, jnp.where(accm_v, a_v, 0.0))
        v_n1 = jnp.where(fire_v, ak2_v, 0.0)
        row = (jnp.where(iota_l == ntok_old, v_n, 0.0)
               + jnp.where(iota_l == ntok_old + 1, v_n1, 0.0))        # [B, Lpad]
        aws_ref[pl.ds(jj, 1), :, :] = row[None]                        # lane-dense store

        accv_ref[...] = jnp.where(fire_v, ak2_v, new_v)
        ntokv_ref[...] = ntok_old + fire_v.astype(jnp.int32)
        return carry

    lax.fori_loop(0, tile_t, step, 0)


def cif_integrate(eouts, alpha_norm, elens, ylens, ymax, beta):
    B, T, D = eouts.shape
    Lp1 = ymax + 1
    Lpad = _round_up(Lp1, 128)                  # lane-dense aws rows
    tile_t = min(128, _round_up(T, 8))
    Tpad = _round_up(T, tile_t)
    if Tpad != T:
        # zero-padded alpha => padded steps are no-ops in the recurrence
        eouts = jnp.pad(eouts, ((0, 0), (0, Tpad - T), (0, 0)))
        alpha_norm = jnp.pad(alpha_norm, ((0, 0), (0, Tpad - T)))
    alpha_norm = alpha_norm.astype(jnp.float32)

    eouts_t = jnp.transpose(eouts, (1, 0, 2))                    # [Tpad, B, D] native dtype
    anorm_t = jnp.transpose(alpha_norm, (1, 0))[:, :, None]      # [Tpad, B, 1]
    elens_i = elens.reshape(B).astype(jnp.int32)
    ylens_i = ylens.reshape(B).astype(jnp.int32)

    cv, aws_t = pl.pallas_call(
        functools.partial(_cif_kernel, beta=float(beta), tile_t=tile_t, B=B),
        out_shape=(jax.ShapeDtypeStruct((B, Lp1, D), jnp.float32),
                   jax.ShapeDtypeStruct((Tpad, B, Lpad), jnp.float32)),
        grid=(Tpad // tile_t,),
        in_specs=[
            pl.BlockSpec(memory_space=pltpu.MemorySpace.SMEM),      # alpha_norm [B, Tpad]
            pl.BlockSpec(memory_space=pltpu.MemorySpace.SMEM),      # elens [B]
            pl.BlockSpec(memory_space=pltpu.MemorySpace.SMEM),      # ylens [B]
            pl.BlockSpec((tile_t, B, D), lambda t: (t, 0, 0)),      # eouts chunk (VMEM)
            pl.BlockSpec((tile_t, B, 1), lambda t: (t, 0, 0)),      # alpha_norm chunk (vector)
            pl.BlockSpec((B, 1), lambda t: (0, 0)),                 # elens vector
            pl.BlockSpec((B, 1), lambda t: (0, 0)),                 # ylens vector
        ],
        out_specs=(
            pl.BlockSpec((B, Lp1, D), lambda t: (0, 0, 0)),         # cv (VMEM-resident)
            pl.BlockSpec((tile_t, B, Lpad), lambda t: (t, 0, 0)),   # aws (time-major)
        ),
        scratch_shapes=[
            pltpu.VMEM((B, D), jnp.float32),     # integrate state
            pltpu.VMEM((B, 1), jnp.float32),     # alpha_accum (vector)
            pltpu.VMEM((B, 1), jnp.int32),       # n_tokens (vector)
            pltpu.SMEM((B,), jnp.float32),       # alpha_accum (scalar mirror)
            pltpu.SMEM((B,), jnp.int32),         # n_tokens (scalar mirror)
        ],
        compiler_params=pltpu.CompilerParams(
            dimension_semantics=("arbitrary",),
            vmem_limit_bytes=_VMEM_LIMIT),
    )(alpha_norm, elens_i, ylens_i, eouts_t, anorm_t,
      elens_i.reshape(B, 1), ylens_i.reshape(B, 1))

    # layout plumbing: [Tpad, B, Lpad] -> [B, L+1, T]
    aws = jnp.transpose(aws_t, (1, 2, 0))[:, :Lp1, :T]
    return cv, aws


# -----------------------------------------------------------------------------
# Full forward (parallel mode)
# -----------------------------------------------------------------------------
def cif_forward(eouts, elens, ylens, params, window, threshold=1.0,
                layer_norm_eps=1e-12, ymax=None, mxu_dtype=jnp.bfloat16):
    B, T, D = eouts.shape
    alpha_raw = cif_alpha(eouts, params, window, eps=layer_norm_eps,
                          mxu_dtype=mxu_dtype)                        # [B, T]
    mask = jnp.arange(T, dtype=jnp.int32)[None, :] < elens[:, None]
    alpha = jnp.where(mask, alpha_raw, 0.0)
    asum = jnp.sum(alpha, axis=1, keepdims=True)
    # guard: all-masked rows would produce NaN in the reference; keep them finite
    alpha_norm = alpha / jnp.where(asum > 0, asum, 1.0) \
        * ylens.astype(jnp.float32)[:, None]
    if ymax is None:
        ymax = int(jnp.max(ylens))     # host sync; pass ymax statically to avoid it
    cv_full, aws_full = cif_integrate(eouts, alpha_norm, elens, ylens, ymax,
                                      threshold)
    cv = cv_full[:, :ymax]
    aws = aws_full[:, :ymax]
    attn_state = {"alpha": alpha, "alpha_norm": alpha_norm}          # alpha_norm: extra (testing)
    return cv, aws, attn_state


# -----------------------------------------------------------------------------
# Deterministic parameter init (synthetic, not a checkpoint load)
# -----------------------------------------------------------------------------
def init_params(key, enc_dim, window):
    kw, kb, kp = jax.random.split(key, 3)
    conv_w = jax.random.normal(kw, (enc_dim, enc_dim, window), jnp.float32) \
        * (1.0 / np.sqrt(enc_dim * window))                          # [O, I, W]
    conv_b = jax.random.normal(kb, (enc_dim,), jnp.float32) * 0.05
    ln_gamma = jnp.ones((enc_dim,), jnp.float32)
    ln_beta = jnp.zeros((enc_dim,), jnp.float32)
    proj_w = jax.random.normal(kp, (1, enc_dim), jnp.float32) \
        * (1.0 / np.sqrt(enc_dim))                                   # [1, D]
    proj_b = jnp.zeros((1,), jnp.float32)
    return dict(conv_w=conv_w, conv_b=conv_b, ln_gamma=ln_gamma,
                ln_beta=ln_beta, proj_w=proj_w, proj_b=proj_b)


# -----------------------------------------------------------------------------
# Pure-JAX / numpy references for validation
# -----------------------------------------------------------------------------
def ref_alpha(eouts, params, window, eps=1e-12):
    B, T, D = eouts.shape
    pad = (window - 1) // 2
    xpad = jnp.pad(eouts, ((0, 0), (pad, pad), (0, 0)))
    wk = jnp.transpose(params["conv_w"], (2, 1, 0))
    conv = jnp.broadcast_to(params["conv_b"][None, None, :], (B, T, D)).astype(jnp.float32)
    for k in range(window):
        conv = conv + jnp.einsum("bti,io->bto", xpad[:, k:k + T, :], wk[k],
                                 precision=lax.Precision.HIGHEST)
    mean = jnp.mean(conv, -1, keepdims=True)
    var = jnp.mean(jnp.square(conv - mean), -1, keepdims=True)
    h = (conv - mean) * lax.rsqrt(var + eps) * params["ln_gamma"] + params["ln_beta"]
    h = jnp.maximum(h, 0.0)
    logit = jnp.einsum("btd,d->bt", h, params["proj_w"][0],
                       precision=lax.Precision.HIGHEST) + params["proj_b"][0]
    return jax.nn.sigmoid(logit)


def ref_cif_loop(eouts, alpha_norm, elens, ylens, ymax, beta):
    # Mirrors the PyTorch loop (parallel mode, per-batch aws writes).
    B, T, D = eouts.shape
    cv = np.zeros((B, ymax + 1, D), np.float32)
    aws = np.zeros((B, ymax + 1, T), np.float32)
    n_tokens = np.zeros(B, np.int64)
    state = np.zeros((B, D), np.float32)
    alpha_accum = np.zeros(B, np.float32)
    for j in range(T):
        prev = alpha_accum.copy()
        alpha_accum = alpha_accum + alpha_norm[:, j]
        if (alpha_accum >= beta).sum() == 0:
            state = state + alpha_norm[:, j, None] * eouts[:, j]
            for b in range(B):
                aws[b, n_tokens[b], j] += alpha_norm[b, j]
        else:
            for b in range(B):
                if j > elens[b] - 1:
                    continue
                if n_tokens[b] >= ylens[b]:
                    continue
                if alpha_accum[b] < beta:
                    state[b] = state[b] + alpha_norm[b, j] * eouts[b, j]
                    aws[b, n_tokens[b], j] += alpha_norm[b, j]
                else:
                    ak1 = np.float32(1.0) - prev[b]
                    ak2 = alpha_norm[b, j] - ak1
                    cv[b, n_tokens[b]] = state[b] + ak1 * eouts[b, j]
                    aws[b, n_tokens[b], j] += ak1
                    n_tokens[b] += 1
                    state[b] = ak2 * eouts[b, j]
                    alpha_accum[b] = ak2
                    aws[b, n_tokens[b], j] += ak2
    return cv[:, :ymax], aws[:, :ymax]


if __name__ == "__main__":
    B, T, D, W = 2, 16, 32, 3
    key = jax.random.PRNGKey(0)
    k_in, k_par = jax.random.split(key)
    eouts = jax.random.normal(k_in, (B, T, D), jnp.float32)
    elens_list, ylens_list = [16, 12], [4, 3]
    elens = jnp.array(elens_list, jnp.int32)
    ylens = jnp.array(ylens_list, jnp.int32)
    ymax_static = max(ylens_list)            # static: avoids a device->host sync
    params = init_params(k_par, D, W)

    cv, aws, attn_state = cif_forward(eouts, elens, ylens, params, window=W,
                                      threshold=1.0, ymax=ymax_static)
    jax.block_until_ready((cv, aws, attn_state["alpha"]))

    # --- validation against pure-JAX / numpy references ---
    # alpha tolerance relaxed because the conv matmul runs with bf16 operands.
    mask_np = np.arange(T)[None, :] < np.asarray(elens)[:, None]
    alpha_ref = np.where(mask_np, np.asarray(ref_alpha(eouts, params, W)), 0.0)
    np.testing.assert_allclose(np.asarray(attn_state["alpha"]), alpha_ref,
                               rtol=0, atol=1e-2)

    cv_ref, aws_ref = ref_cif_loop(np.asarray(eouts, np.float32),
                                   np.asarray(attn_state["alpha_norm"], np.float32),
                                   np.asarray(elens), np.asarray(ylens),
                                   ymax_static, 1.0)
    np.testing.assert_allclose(np.asarray(cv), cv_ref, rtol=0, atol=1e-4)
    np.testing.assert_allclose(np.asarray(aws), aws_ref, rtol=0, atol=1e-4)

    assert cv.shape == (B, ymax_static, D) and aws.shape == (B, ymax_static, T)
    print("KERNEL_OK")
</pallas_src>

<mosaic_0001>
module attributes {stable_mosaic.version = 11 : i64} {
  func.func @_alpha_kernel(%arg0: i32, %arg1: memref<1x18x32xf32, #tpu.memory_space<vmem>>, %arg2: memref<96x32xbf16, #tpu.memory_space<vmem>>, %arg3: memref<1x32xf32, #tpu.memory_space<vmem>>, %arg4: memref<1x32xf32, #tpu.memory_space<vmem>>, %arg5: memref<1x32xf32, #tpu.memory_space<vmem>>, %arg6: memref<1x32xf32, #tpu.memory_space<vmem>>, %arg7: memref<1x1xf32, #tpu.memory_space<vmem>>, %arg8: memref<1x1x16xf32, #tpu.memory_space<vmem>>) attributes {dimension_semantics = [#tpu.dimension_semantics<parallel>], iteration_bounds = array<i64: 2>, scalar_prefetch = 0 : i64, scratch_operands = 0 : i64, tpu.core_type = #tpu.core_type<tc>, window_params = [{transform_indices = @transform_0, window_bounds = array<i64: 1, 18, 32>}, {pipeline_mode = #tpu.pipeline_mode<synchronous>, transform_indices = @transform_1, window_bounds = array<i64: 96, 32>}, {pipeline_mode = #tpu.pipeline_mode<synchronous>, transform_indices = @transform_2, window_bounds = array<i64: 1, 32>}, {pipeline_mode = #tpu.pipeline_mode<synchronous>, transform_indices = @transform_3, window_bounds = array<i64: 1, 32>}, {pipeline_mode = #tpu.pipeline_mode<synchronous>, transform_indices = @transform_4, window_bounds = array<i64: 1, 32>}, {pipeline_mode = #tpu.pipeline_mode<synchronous>, transform_indices = @transform_5, window_bounds = array<i64: 1, 32>}, {pipeline_mode = #tpu.pipeline_mode<synchronous>, transform_indices = @transform_6, window_bounds = array<i64: 1, 1>}, {transform_indices = @transform_7, window_bounds = array<i64: 1, 1, 16>}]} {
    %c0 = arith.constant 0 : index
    %c0_0 = arith.constant 0 : index
    %c0_1 = arith.constant 0 : index
    %0 = vector.load %arg1[%c0, %c0_0, %c0_1] : memref<1x18x32xf32, #tpu.memory_space<vmem>>, vector<1x18x32xf32>
    %1 = vector.shape_cast %0 : vector<1x18x32xf32> to vector<18x32xf32>
    %2 = vector.extract_strided_slice %1 {offsets = [0, 0], sizes = [16, 32], strides = [1, 1]} : vector<18x32xf32> to vector<16x32xf32>
    %3 = arith.truncf %2 : vector<16x32xf32> to vector<16x32xbf16>
    %4 = vector.extract_strided_slice %1 {offsets = [1, 0], sizes = [16, 32], strides = [1, 1]} : vector<18x32xf32> to vector<16x32xf32>
    %5 = arith.truncf %4 : vector<16x32xf32> to vector<16x32xbf16>
    %6 = vector.extract_strided_slice %1 {offsets = [2, 0], sizes = [16, 32], strides = [1, 1]} : vector<18x32xf32> to vector<16x32xf32>
    %7 = arith.truncf %6 : vector<16x32xf32> to vector<16x32xbf16>
    %8 = tpu.concatenate %3, %5, %7 in 1 : vector<16x32xbf16>, vector<16x32xbf16>, vector<16x32xbf16> -> vector<16x96xbf16>
    %c0_2 = arith.constant 0 : index
    %c0_3 = arith.constant 0 : index
    %9 = vector.load %arg2[%c0_2, %c0_3] : memref<96x32xbf16, #tpu.memory_space<vmem>>, vector<96x32xbf16>
    %cst = arith.constant dense<0.000000e+00> : vector<16x32xf32>
    %10 = tpu.matmul %8, %9, %cst {dimension_numbers = #tpu.dot_dimension_numbers<[1], [0], [0], [1], [0, 0, 1, 1], [], []>} : vector<16x96xbf16>, vector<96x32xbf16>, vector<16x32xf32> -> vector<16x32xf32>
    %c0_4 = arith.constant 0 : index
    %c0_5 = arith.constant 0 : index
    %11 = vector.load %arg3[%c0_4, %c0_5] : memref<1x32xf32, #tpu.memory_space<vmem>>, vector<1x32xf32>
    %12 = vector.broadcast %11 : vector<1x32xf32> to vector<16x32xf32>
    %13 = arith.addf %10, %12 : vector<16x32xf32>
    %cst_6 = arith.constant dense<0.000000e+00> : vector<16xf32>
    %14 = vector.multi_reduction <add>, %13, %cst_6 [1] : vector<16x32xf32> to vector<16xf32>
    %15 = vector.shape_cast %14 : vector<16xf32> to vector<16x1xf32>
    %cst_7 = arith.constant 3.200000e+01 : f32
    %16 = vector.broadcast %cst_7 : f32 to vector<16x1xf32>
    %17 = arith.divf %15, %16 : vector<16x1xf32>
    %18 = vector.broadcast %17 : vector<16x1xf32> to vector<16x32xf32>
    %19 = arith.subf %13, %18 : vector<16x32xf32>
    %20 = arith.mulf %19, %19 : vector<16x32xf32>
    %cst_8 = arith.constant dense<0.000000e+00> : vector<16xf32>
    %21 = vector.multi_reduction <add>, %20, %cst_8 [1] : vector<16x32xf32> to vector<16xf32>
    %22 = vector.shape_cast %21 : vector<16xf32> to vector<16x1xf32>
    %cst_9 = arith.constant 3.200000e+01 : f32
    %23 = vector.broadcast %cst_9 : f32 to vector<16x1xf32>
    %24 = arith.divf %22, %23 : vector<16x1xf32>
    %25 = vector.broadcast %17 : vector<16x1xf32> to vector<16x32xf32>
    %26 = arith.subf %13, %25 : vector<16x32xf32>
    %cst_10 = arith.constant 9.99999996E-13 : f32
    %27 = vector.broadcast %cst_10 : f32 to vector<16x1xf32>
    %28 = arith.addf %24, %27 : vector<16x1xf32>
    %29 = math.rsqrt %28 : vector<16x1xf32>
    %30 = vector.broadcast %29 : vector<16x1xf32> to vector<16x32xf32>
    %31 = arith.mulf %26, %30 : vector<16x32xf32>
    %c0_11 = arith.constant 0 : index
    %c0_12 = arith.constant 0 : index
    %32 = vector.load %arg4[%c0_11, %c0_12] : memref<1x32xf32, #tpu.memory_space<vmem>>, vector<1x32xf32>
    %33 = vector.broadcast %32 : vector<1x32xf32> to vector<16x32xf32>
    %34 = arith.mulf %31, %33 : vector<16x32xf32>
    %c0_13 = arith.constant 0 : index
    %c0_14 = arith.constant 0 : index
    %35 = vector.load %arg5[%c0_13, %c0_14] : memref<1x32xf32, #tpu.memory_space<vmem>>, vector<1x32xf32>
    %36 = vector.broadcast %35 : vector<1x32xf32> to vector<16x32xf32>
    %37 = arith.addf %34, %36 : vector<16x32xf32>
    %cst_15 = arith.constant 0.000000e+00 : f32
    %38 = vector.broadcast %cst_15 : f32 to vector<16x32xf32>
    %39 = arith.maximumf %37, %38 : vector<16x32xf32>
    %c0_16 = arith.constant 0 : index
    %c0_17 = arith.constant 0 : index
    %40 = vector.load %arg6[%c0_16, %c0_17] : memref<1x32xf32, #tpu.memory_space<vmem>>, vector<1x32xf32>
    %cst_18 = arith.constant dense<0.000000e+00> : vector<1x16xf32>
    %41 = tpu.matmul %40, %39, %cst_18 {dimension_numbers = #tpu.dot_dimension_numbers<[1], [1], [0], [0], [0, 0, 1, 0], [], []>} : vector<1x32xf32>, vector<16x32xf32>, vector<1x16xf32> -> vector<1x16xf32>
    %c0_19 = arith.constant 0 : index
    %c0_20 = arith.constant 0 : index
    %42 = vector.load %arg7[%c0_19, %c0_20] : memref<1x1xf32, #tpu.memory_space<vmem>>, vector<1x1xf32>
    %43 = vector.broadcast %42 : vector<1x1xf32> to vector<1x16xf32>
    %44 = arith.addf %41, %43 : vector<1x16xf32>
    %45 = arith.negf %44 : vector<1x16xf32>
    %46 = math.exp %45 : vector<1x16xf32>
    %cst_21 = arith.constant 1.000000e+00 : f32
    %47 = vector.broadcast %cst_21 : f32 to vector<1x16xf32>
    %48 = arith.addf %47, %46 : vector<1x16xf32>
    %49 = arith.divf %47, %48 : vector<1x16xf32>
    %c0_22 = arith.constant 0 : index
    %c0_23 = arith.constant 0 : index
    %c0_24 = arith.constant 0 : index
    %50 = vector.load %arg8[%c0_22, %c0_23, %c0_24] : memref<1x1x16xf32, #tpu.memory_space<vmem>>, vector<1x1x16xf32>
    %51 = vector.shape_cast %50 : vector<1x1x16xf32> to vector<1x16xf32>
    %52 = vector.shape_cast %49 : vector<1x16xf32> to vector<1x1x16xf32>
    tpu.vector_store %arg8[%c0_22, %c0_23, %c0_24], %52 {strides = array<i32>} : memref<1x1x16xf32, #tpu.memory_space<vmem>>, vector<1x1x16xf32>,
    return
  }
  func.func @transform_0(%arg0: i32) -> (i32, i32, i32) {
    %c0_i32 = arith.constant 0 : i32
    %c0_i32_0 = arith.constant 0 : i32
    %c0_i32_1 = arith.constant 0 : i32
    return %arg0, %c0_i32, %c0_i32_0 : i32, i32, i32
  }
  func.func @transform_1(%arg0: i32) -> (i32, i32) {
    %c0_i32 = arith.constant 0 : i32
    %c0_i32_0 = arith.constant 0 : i32
    %c0_i32_1 = arith.constant 0 : i32
    return %c0_i32, %c0_i32_0 : i32, i32
  }
  func.func @transform_2(%arg0: i32) -> (i32, i32) {
    %c0_i32 = arith.constant 0 : i32
    %c0_i32_0 = arith.constant 0 : i32
    %c0_i32_1 = arith.constant 0 : i32
    return %c0_i32, %c0_i32_0 : i32, i32
  }
  func.func @transform_3(%arg0: i32) -> (i32, i32) {
    %c0_i32 = arith.constant 0 : i32
    %c0_i32_0 = arith.constant 0 : i32
    %c0_i32_1 = arith.constant 0 : i32
    return %c0_i32, %c0_i32_0 : i32, i32
  }
  func.func @transform_4(%arg0: i32) -> (i32, i32) {
    %c0_i32 = arith.constant 0 : i32
    %c0_i32_0 = arith.constant 0 : i32
    %c0_i32_1 = arith.constant 0 : i32
    return %c0_i32, %c0_i32_0 : i32, i32
  }
  func.func @transform_5(%arg0: i32) -> (i32, i32) {
    %c0_i32 = arith.constant 0 : i32
    %c0_i32_0 = arith.constant 0 : i32
    %c0_i32_1 = arith.constant 0 : i32
    return %c0_i32, %c0_i32_0 : i32, i32
  }
  func.func @transform_6(%arg0: i32) -> (i32, i32) {
    %c0_i32 = arith.constant 0 : i32
    %c0_i32_0 = arith.constant 0 : i32
    %c0_i32_1 = arith.constant 0 : i32
    return %c0_i32, %c0_i32_0 : i32, i32
  }
  func.func @transform_7(%arg0: i32) -> (i32, i32, i32) {
    %c0_i32 = arith.constant 0 : i32
    %c0_i32_0 = arith.constant 0 : i32
    %c0_i32_1 = arith.constant 0 : i32
    return %arg0, %c0_i32, %c0_i32_0 : i32, i32, i32
  }
}

</mosaic_0001>

<llo_original>
// kernel: tpu_custom_call.1
$region0: #{tpu_custom_call.1}
  #allocation0 [shape = 'u32[]', space=smem, size = 0x4, offset = 0x4, fixed_abs, tag = 'smem constant byte address 0x4 - core index']
  #allocation1 [shape = 'u32[144,128]{1,0:T(1,128)}', space=vmem, size = 0x12000, scoped, tag = 'internal scratch']
  #allocation2 [shape = 'f32[1,1]{1,0:T(1,128)S(1)}', space=vmem, size = 0x200, scoped, tag = 'scoped memory for tpu_custom_call.1']
  %s0 = inlined_call_operand.vmem [shape: f32[2,18,32], index: 0, kind: input, shape index: {}]
  %s1 = inlined_call_operand.vmem [shape: bf16[96,32], index: 1, kind: input, shape index: {}]
  %s2 = inlined_call_operand.vmem [shape: f32[1,32], index: 2, kind: input, shape index: {}]
  %s3 = inlined_call_operand.vmem [shape: f32[1,32], index: 3, kind: input, shape index: {}]
  %s4 = inlined_call_operand.vmem [shape: f32[1,32], index: 4, kind: input, shape index: {}]
  %s5 = inlined_call_operand.vmem [shape: f32[1,32], index: 5, kind: input, shape index: {}]
  %s6 = inlined_call_operand.<no memory space> [shape: f32[1,1], index: 6, kind: input, shape index: {}]
  %s7 = inlined_call_operand.hbm [shape: f32[2,1,16], index: 7, kind: output, shape index: {}]
  %s8 = sld [smem:[#allocation0]]
  $region61: #{tpu_custom_call.1} parent=0
    _
  %s10 = ssub.s32 1, %s8
  %s11 = scalar_select 0, %s10, %s8
  %v12 = vstv %s6
  %13 = vst [vmem:[#allocation2] sm:$0x1] %v12
  $region1: #{tpu_custom_call.1} parent=0
    #allocation3 [shape = 'u8[1024]{0}', space=vmem, size = 0x400, scoped, tag = 'output window, operand 0']
    #allocation4 [shape = 's32[2]{0}', space=sflag, size = 0x8, scoped, tag = 'scoped memory for tpu_custom_call.1']
    %14 = vsyncpa [#allocation4], 0
    %s15 = scalar_lea.sflag [#allocation4], 1
    %16 = vsyncpa %s15, 0
    loop: start=0, step=1, limit=4
    $region2: #{tpu_custom_call.1} parent=1 // loop_pre_header
      _
    $region3: #{tpu_custom_call.1} parent=1 // loop_header
      %s18 = sphi 0, %s22
      %p19 = scmp.ge.s32.totalorder %s18, 4
      %s28 = sphi 0, %s30
      %s31 = sphi 0, %s28
      %s32 = sphi 0, %s31
      %s48 = sphi 0, %s32
      %s52 = sphi 0, %s52
      %s54 = sphi 0, %s52
      %s55 = sphi 0, %s54
      %s69 = sphi 0, %s55
      %s73 = sphi 0, %s73
      %s75 = sphi 0, %s73
      %s76 = sphi 0, %s75
      %s90 = sphi 0, %s76
      %s94 = sphi 0, %s94
      %s96 = sphi 0, %s94
      %s97 = sphi 0, %s96
      %s111 = sphi 0, %s97
      %s115 = sphi 0, %s115
      %s117 = sphi 0, %s115
      %s118 = sphi 0, %s117
      %s132 = sphi 0, %s118
      %s136 = sphi 0, %s136
      %s138 = sphi 0, %s136
      %s139 = sphi 0, %s138
      %s153 = sphi 0, %s139
      %s157 = sphi 0, %s157
      %s159 = sphi 0, %s157
      %s160 = sphi 0, %s159
      %s174 = sphi 0, %s160
      %s180 = sphi 0, %s182
      %s183 = sphi 0, %s180
      %s184 = sphi 0, %s183
      %s200 = sphi 0, %s184
    $region4: #{tpu_custom_call.1} parent=1 // loop_header_branch
      %21 = sbr.rel (%p19) target = $region8
    $region5: #{tpu_custom_call.1} parent=1 // loop_body
      %s23 = ssub.s32 %s18, 1
      %s24 = ssub.s32 %s18, 2
      %s25 = sadd.s32 %s18, 1
      %s26 = ssub.s32 %s18, %s25
      %p27 = scmp.eq.s32.totalorder %s26, 0
      %s29 = sadd.s32 %s28, 1
      %s30 = scalar_select %p27, %s28, %s29
      %p33 = pneg %p27
      %p34 = scmp.eq.s32.totalorder %s18, 1
      %p35 = por %p33, %p34
      %p36 = scmp.ne.s32.totalorder %s28, %s31
      %p37 = scmp.eq.s32.totalorder %s18, 0
      %p38 = por %p36, %p37
      %p39 = scmp.ne.s32.totalorder %s28, %s31
      %p40 = scmp.eq.s32.totalorder %s23, 1
      %p41 = por %p39, %p40
      %p42 = scmp.ne.s32.totalorder %s31, %s32
      %p43 = scmp.eq.s32.totalorder %s23, 0
      %p44 = por %p42, %p43
      %p45 = scmp.ne.s32.totalorder %s31, %s32
      %p46 = scmp.eq.s32.totalorder %s24, 1
      %p47 = por %p45, %p46
      %p49 = scmp.ne.s32.totalorder %s32, %s48
      %p50 = scmp.eq.s32.totalorder %s24, 0
      %p51 = por %p49, %p50
      %s53 = sadd.s32 %s52, 1
      %p56 = scmp.eq.s32.totalorder %s18, 1
      %p57 = scmp.ne.s32.totalorder %s52, %s54
      %p58 = scmp.eq.s32.totalorder %s18, 0
      %p59 = por %p57, %p58
      %p60 = scmp.ne.s32.totalorder %s52, %s54
      %p61 = scmp.eq.s32.totalorder %s23, 1
      %p62 = por %p60, %p61
      %p63 = scmp.ne.s32.totalorder %s54, %s55
      %p64 = scmp.eq.s32.totalorder %s23, 0
      %p65 = por %p63, %p64
      %p66 = scmp.ne.s32.totalorder %s54, %s55
      %p67 = scmp.eq.s32.totalorder %s24, 1
      %p68 = por %p66, %p67
      %p70 = scmp.ne.s32.totalorder %s55, %s69
      %p71 = scmp.eq.s32.totalorder %s24, 0
      %p72 = por %p70, %p71
      %s74 = sadd.s32 %s73, 1
      %p77 = scmp.eq.s32.totalorder %s18, 1
      %p78 = scmp.ne.s32.totalorder %s73, %s75
      %p79 = scmp.eq.s32.totalorder %s18, 0
      %p80 = por %p78, %p79
      %p81 = scmp.ne.s32.totalorder %s73, %s75
      %p82 = scmp.eq.s32.totalorder %s23, 1
      %p83 = por %p81, %p82
      %p84 = scmp.ne.s32.totalorder %s75, %s76
      %p85 = scmp.eq.s32.totalorder %s23, 0
      %p86 = por %p84, %p85
      %p87 = scmp.ne.s32.totalorder %s75, %s76
      %p88 = scmp.eq.s32.totalorder %s24, 1
      %p89 = por %p87, %p88
      %p91 = scmp.ne.s32.totalorder %s76, %s90
      %p92 = scmp.eq.s32.totalorder %s24, 0
      %p93 = por %p91, %p92
      %s95 = sadd.s32 %s94, 1
      %p98 = scmp.eq.s32.totalorder %s18, 1
      %p99 = scmp.ne.s32.totalorder %s94, %s96
      %p100 = scmp.eq.s32.totalorder %s18, 0
      %p101 = por %p99, %p100
      %p102 = scmp.ne.s32.totalorder %s94, %s96
      %p103 = scmp.eq.s32.totalorder %s23, 1
      %p104 = por %p102, %p103
      %p105 = scmp.ne.s32.totalorder %s96, %s97
      %p106 = scmp.eq.s32.totalorder %s23, 0
      %p107 = por %p105, %p106
      %p108 = scmp.ne.s32.totalorder %s96, %s97
      %p109 = scmp.eq.s32.totalorder %s24, 1
      %p110 = por %p108, %p109
      %p112 = scmp.ne.s32.totalorder %s97, %s111
      %p113 = scmp.eq.s32.totalorder %s24, 0
      %p114 = por %p112, %p113
      %s116 = sadd.s32 %s115, 1
      %p119 = scmp.eq.s32.totalorder %s18, 1
      %p120 = scmp.ne.s32.totalorder %s115, %s117
      %p121 = scmp.eq.s32.totalorder %s18, 0
      %p122 = por %p120, %p121
      %p123 = scmp.ne.s32.totalorder %s115, %s117
      %p124 = scmp.eq.s32.totalorder %s23, 1
      %p125 = por %p123, %p124
      %p126 = scmp.ne.s32.totalorder %s117, %s118
      %p127 = scmp.eq.s32.totalorder %s23, 0
      %p128 = por %p126, %p127
      %p129 = scmp.ne.s32.totalorder %s117, %s118
      %p130 = scmp.eq.s32.totalorder %s24, 1
      %p131 = por %p129, %p130
      %p133 = scmp.ne.s32.totalorder %s118, %s132
      %p134 = scmp.eq.s32.totalorder %s24, 0
      %p135 = por %p133, %p134
      %s137 = sadd.s32 %s136, 1
      %p140 = scmp.eq.s32.totalorder %s18, 1
      %p141 = scmp.ne.s32.totalorder %s136, %s138
      %p142 = scmp.eq.s32.totalorder %s18, 0
      %p143 = por %p141, %p142
      %p144 = scmp.ne.s32.totalorder %s136, %s138
      %p145 = scmp.eq.s32.totalorder %s23, 1
      %p146 = por %p144, %p145
      %p147 = scmp.ne.s32.totalorder %s138, %s139
      %p148 = scmp.eq.s32.totalorder %s23, 0
      %p149 = por %p147, %p148
      %p150 = scmp.ne.s32.totalorder %s138, %s139
      %p151 = scmp.eq.s32.totalorder %s24, 1
      %p152 = por %p150, %p151
      %p154 = scmp.ne.s32.totalorder %s139, %s153
      %p155 = scmp.eq.s32.totalorder %s24, 0
      %p156 = por %p154, %p155
      %s158 = sadd.s32 %s157, 1
      %p161 = scmp.eq.s32.totalorder %s18, 1
      %p162 = scmp.ne.s32.totalorder %s157, %s159
      %p163 = scmp.eq.s32.totalorder %s18, 0
      %p164 = por %p162, %p163
      %p165 = scmp.ne.s32.totalorder %s157, %s159
      %p166 = scmp.eq.s32.totalorder %s23, 1
      %p167 = por %p165, %p166
      %p168 = scmp.ne.s32.totalorder %s159, %s160
      %p169 = scmp.eq.s32.totalorder %s23, 0
      %p170 = por %p168, %p169
      %p171 = scmp.ne.s32.totalorder %s159, %s160
      %p172 = scmp.eq.s32.totalorder %s24, 1
      %p173 = por %p171, %p172
      %p175 = scmp.ne.s32.totalorder %s160, %s174
      %p176 = scmp.eq.s32.totalorder %s24, 0
      %p177 = por %p175, %p176
      %s178 = ssub.s32 %s18, %s25
      %p179 = scmp.eq.s32.totalorder %s178, 0
      %s181 = sadd.s32 %s180, 1
      %s182 = scalar_select %p179, %s180, %s181
      %p185 = pneg %p179
      %p186 = scmp.eq.s32.totalorder %s18, 1
      %p187 = por %p185, %p186
      %p188 = scmp.ne.s32.totalorder %s180, %s183
      %p189 = scmp.eq.s32.totalorder %s18, 0
      %p190 = por %p188, %p189
      %p191 = scmp.ne.s32.totalorder %s180, %s183
      %p192 = scmp.eq.s32.totalorder %s23, 1
      %p193 = por %p191, %p192
      %p194 = scmp.ne.s32.totalorder %s183, %s184
      %p195 = scmp.eq.s32.totalorder %s23, 0
      %p196 = por %p194, %p195
      %p197 = scmp.ne.s32.totalorder %s183, %s184
      %p198 = scmp.eq.s32.totalorder %s24, 1
      %p199 = por %p197, %p198
      %p201 = scmp.ne.s32.totalorder %s184, %s200
      %p202 = scmp.eq.s32.totalorder %s24, 0
      %p203 = por %p201, %p202
      %p204 = scmp.le.s32.totalorder 1, %s18
      %p205 = scmp.lt.s32.totalorder %s18, 3
      %p206 = pnand %p204, %p205
      %p207 = pneg %p206
      // Predicated region
      $region9: #{tpu_custom_call.1} parent=5 // pred_check
        _
      $region10: #{tpu_custom_call.1} parent=5 // pred_check_branch
        %209 = sbr.rel (%p206) target = $region12
      $region11: #{tpu_custom_call.1} parent=5 // pred_region
        %s210 = ssub.s32 %s18, 1
        // Predicated region
        $region13: #{tpu_custom_call.1} parent=11 // pred_check
          %p211 = pneg %p65
        $region14: #{tpu_custom_call.1} parent=11 // pred_check_branch
          %213 = sbr.rel (%p211) target = $region16
        $region15: #{tpu_custom_call.1} parent=11 // pred_region
          _
        $region16: #{tpu_custom_call.1} parent=11 // pred_fallthru
          _
        // Predicated region
        $region17: #{tpu_custom_call.1} parent=11 // pred_check
          %p214 = pneg %p86
        $region18: #{tpu_custom_call.1} parent=11 // pred_check_branch
          %216 = sbr.rel (%p214) target = $region20
        $region19: #{tpu_custom_call.1} parent=11 // pred_region
          _
        $region20: #{tpu_custom_call.1} parent=11 // pred_fallthru
          _
        // Predicated region
        $region21: #{tpu_custom_call.1} parent=11 // pred_check
          %p217 = pneg %p107
        $region22: #{tpu_custom_call.1} parent=11 // pred_check_branch
          %219 = sbr.rel (%p217) target = $region24
        $region23: #{tpu_custom_call.1} parent=11 // pred_region
          _
        $region24: #{tpu_custom_call.1} parent=11 // pred_fallthru
          _
        // Predicated region
        $region25: #{tpu_custom_call.1} parent=11 // pred_check
          %p220 = pneg %p128
        $region26: #{tpu_custom_call.1} parent=11 // pred_check_branch
          %222 = sbr.rel (%p220) target = $region28
        $region27: #{tpu_custom_call.1} parent=11 // pred_region
          _
        $region28: #{tpu_custom_call.1} parent=11 // pred_fallthru
          _
        // Predicated region
        $region29: #{tpu_custom_call.1} parent=11 // pred_check
          %p223 = pneg %p149
        $region30: #{tpu_custom_call.1} parent=11 // pred_check_branch
          %225 = sbr.rel (%p223) target = $region32
        $region31: #{tpu_custom_call.1} parent=11 // pred_region
          _
        $region32: #{tpu_custom_call.1} parent=11 // pred_fallthru
          _
        // Predicated region
        $region33: #{tpu_custom_call.1} parent=11 // pred_check
          %p226 = pneg %p170
        $region34: #{tpu_custom_call.1} parent=11 // pred_check_branch
          %228 = sbr.rel (%p226) target = $region36
        $region35: #{tpu_custom_call.1} parent=11 // pred_region
          _
        $region36: #{tpu_custom_call.1} parent=11 // pred_fallthru
          _
      $region12: #{tpu_custom_call.1} parent=5 // pred_fallthru
        _
      %p229 = scmp.lt.s32.totalorder %s18, 2
      // Predicated region
      $region37: #{tpu_custom_call.1} parent=5 // pred_check
        %p230 = pneg %p229
      $region38: #{tpu_custom_call.1} parent=5 // pred_check_branch
        %232 = sbr.rel (%p230) target = $region40
      $region39: #{tpu_custom_call.1} parent=5 // pred_region
        // Predicated region
        $region41: #{tpu_custom_call.1} parent=39 // pred_check
          %p233 = pneg %p38
        $region42: #{tpu_custom_call.1} parent=39 // pred_check_branch
          %235 = sbr.rel (%p233) target = $region44
        $region43: #{tpu_custom_call.1} parent=39 // pred_region
          %p236 = scmp.lt.s32.totalorder %s18, 1
          %s237 = scalar_select %p236, %s18, 1
          %s238 = smul.addr %s237, 3
          %s239 = smul.addr %s238, 8
          %s240 = scalar_lea.vmem %s0, %s239
        $region44: #{tpu_custom_call.1} parent=39 // pred_fallthru
          _
      $region40: #{tpu_custom_call.1} parent=5 // pred_fallthru
        _
      %p241 = scmp.le.s32.totalorder 1, %s18
      %p242 = scmp.lt.s32.totalorder %s18, 3
      %p243 = pnand %p241, %p242
      %p244 = pneg %p243
      // Predicated region
      $region45: #{tpu_custom_call.1} parent=5 // pred_check
        _
      $region46: #{tpu_custom_call.1} parent=5 // pred_check_branch
        %246 = sbr.rel (%p243) target = $region48
      $region47: #{tpu_custom_call.1} parent=5 // pred_region
        %s247 = ssub.s32 %s18, 1
        %p248 = scmp.lt.s32.totalorder %s23, 1
        %s249 = scalar_select %p248, %s23, 1
        %s250 = smul.addr %s249, 3
        %s251 = smul.addr %s250, 8
        %s252 = scalar_lea.vmem %s0, %s251
        %p253 = pneg %p44
        %p254 = pneg %p41
        %p255 = pneg %p65
        %p256 = pneg %p62
        %p257 = pneg %p86
        %p258 = pneg %p83
        %p259 = pneg %p107
        %p260 = pneg %p104
        %p261 = pneg %p128
        %p262 = pneg %p125
        %p263 = pneg %p149
        %p264 = pneg %p146
        %p265 = pneg %p170
        %p266 = pneg %p167
        %p267 = pneg %p196
        %p268 = pneg %p193
        %s269 = sand.u32 %s183, 1
        %s270 = scalar_lea.sflag [#allocation4], %s269
        %s271 = sand.u32 %s183, 1
        %s272 = scalar_lea.vmem [#allocation3], %s271
        %p273 = scmp.lt.s32.totalorder %s23, 1
        %s274 = scalar_select %p273, %s23, 1
        %s275 = smul.addr %s274, 3
        %s276 = smul.addr %s275, 8
        %s277 = scalar_lea.vmem %s0, %s276
        %v279 = vld [vmem:[%s277] sm:$0xff]
        %v280 = vld [vmem:[%s277 + $0x8] sm:$0xff]
        %v281 = vld [vmem:[%s277 + $0x10] sm:$0x3]
        %v282 = vpack.c.bf16 %v280, %v279
        %v283 = vpack.c.bf16 %v281, %v281
        %vm284 = vsmask.f32 7424
        %v286 = vshrl.u32 %v282, 16
        %v288 = vshll.u32 %v282, 16
        %v290 = vrot.slane %v288, 1
        %v291 = vor.u32 %v286, %v290
        %v293 = vshll.u32 %v283, 16
        %v295 = vrot.slane %v293, 1
        %v296 = vsel %vm284, %v291, %v295
        %297 = vrot.lane.b32.xlu0 %v296, 32
        %v298 = vpop.permute.xlu0 %297
        %vm301 = vcmask 1046528
        %v302 = vrot.slane %v282, 1
        %v303 = vrot.slane %v283, 1
        %v304 = vsel %vm301, %v302, %v303
        %305 = vrot.lane.b32.xlu0 %v304, 64
        %v306 = vpop.permute.xlu0 %305
        %vm307 = vcmask 261120
        %v309 = vsel %vm307, %v282, %v298
        %vm310 = vcmask 523264
        %v312 = vsel %vm310, %v309, %v306
        %v313 = vld [vmem:[%s1] sm:$0xf]
        %v314 = vld [vmem:[%s1 + $0x4] sm:$0xf]
        %v315 = vld [vmem:[%s1 + $0x8] sm:$0xf]
        %v316 = vld [vmem:[%s1 + $0xc] sm:$0xf]
        %v317 = vld [vmem:[%s1 + $0x10] sm:$0xf]
        %v318 = vld [vmem:[%s1 + $0x14] sm:$0xf]
        %v319 = vld [vmem:[%s1 + $0x18] sm:$0xf]
        %v320 = vld [vmem:[%s1 + $0x1c] sm:$0xf]
        %v321 = vld [vmem:[%s1 + $0x20] sm:$0xf]
        %v322 = vld [vmem:[%s1 + $0x24] sm:$0xf]
        %v323 = vld [vmem:[%s1 + $0x28] sm:$0xf]
        %v324 = vld [vmem:[%s1 + $0x2c] sm:$0xf]
        %v325 = vld [vmem:[%s2] sm:$0x1]
        %v327 = vlaneseq
        %v328 = vshrl.u32 %v327, 7
        %v329 = vsub.s32 0, %v328
        %v330 = vrot.slane %v325, %v329
        %v344 = vunpack.c.l.b16 %v313
        %v345 = vunpack.c.l.b16 %v314
        %v346 = vunpack.c.l.b16 %v315
        %v347 = vunpack.c.l.b16 %v316
        %v348 = vunpack.c.l.b16 %v317
        %v349 = vunpack.c.l.b16 %v318
        %v350 = vunpack.c.l.b16 %v319
        %v351 = vunpack.c.l.b16 %v320
        %v352 = vunpack.c.l.b16 %v321
        %v353 = vunpack.c.l.b16 %v322
        %v354 = vunpack.c.l.b16 %v323
        %v355 = vunpack.c.l.b16 %v324
        %v356 = vpack.c.b16 %v345, %v344
        %v357 = vpack.c.b16 %v347, %v346
        %v358 = vpack.c.b16 %v349, %v348
        %v359 = vpack.c.b16 %v351, %v350
        %v360 = vpack.c.b16 %v353, %v352
        %v361 = vpack.c.b16 %v355, %v354
        %vm368 = vcmask 785408
        %v369 = vsel %vm368, %v312, 0
        %371 = vmatprep.subr.bf16.mxu0 0
        %372 = vmatpush1.bf16.msra.mxu0 0
        %373 = vmatprep.subr.bf16.mxu0 0
        %374 = vmatpush1.bf16.msra.mxu0 0
        %375 = vmatprep.subr.bf16.mxu0 0
        %376 = vmatpush1.bf16.msra.mxu0 %v361
        %377 = vmatprep.subr.bf16.mxu0 0
        %378 = vmatpush1.bf16.msra.mxu0 %v360
        %379 = vmatprep.subr.bf16.mxu0 0
        %380 = vmatpush1.bf16.msra.mxu0 %v359
        %381 = vmatprep.subr.bf16.mxu0 0
        %382 = vmatpush1.bf16.msra.mxu0 %v358
        %383 = vmatprep.subr.bf16.mxu0 0
        %384 = vmatpush1.bf16.msra.mxu0 %v357
        %385 = vmatprep.subr.bf16.mxu0 0
        %386 = vmatpush1.bf16.msra.mxu0 %v356
        %387 = vmatprep.subr.bf16.mxu0 0
        %388 = vmatpush2.bf16.msra.mxu0 0
        %389 = vmatprep.subr.bf16.mxu0 0
        %390 = vmatpush2.bf16.msra.mxu0 0
        %391 = vmatprep.subr.bf16.mxu0 0
        %392 = vmatpush2.bf16.msra.mxu0 0
        %393 = vmatprep.subr.bf16.mxu0 0
        %394 = vmatpush2.bf16.msra.mxu0 0
        %395 = vmatprep.subr.bf16.mxu0 0
        %396 = vmatpush2.bf16.msra.mxu0 0
        %397 = vmatprep.subr.bf16.mxu0 0
        %398 = vmatpush2.bf16.msra.mxu0 0
        %399 = vmatprep.subr.bf16.mxu0 0
        %400 = vmatpush2.bf16.msra.mxu0 0
        %401 = vmatprep.subr.bf16.mxu0 0
        %402 = vmatpush2.bf16.msra.mxu0 0
        %403 = vmatprep.mubr.bf16.mxu0 0
        %404 = vmatmul.mubr.bf16.gmra.mxu0 %v369
        %v405 = vpop.f32.mrf.mxu0
        %v406 = vadd.f32 %v330, %v405
        %v407 = vpop.f32.mrf.mxu0
        %v408 = vpop.f32.mrf.mxu0
        %v409 = vadd.f32 %v330, %v408
        %v410 = vpop.f32.mrf.mxu0
        %411 = vdwg.mxu0
        %v412 = vsel %vm307, %v406, 0.0
        %413 = vadd.xlane.f32.xlu0 %v412
        %v414 = vpop.xlane.xlu0 %413
        %v415 = vsel %vm307, %v409, 0.0
        %416 = vadd.xlane.f32.xlu0 %v415
        %v417 = vpop.xlane.xlu0 %416
        %v418 = vrcp.pop 32.0
        %v419 = vmul.f32 %v414, %v418
        %v420 = vmul.f32 %v417, %v418
        %v421 = vsub.f32 %v406, %v419
        %v422 = vsub.f32 %v409, %v420
        %v423 = vmul.f32 %v421, %v421
        %v424 = vmul.f32 %v422, %v422
        %v425 = vsel %vm307, %v423, 0.0
        %426 = vadd.xlane.f32.xlu0 %v425
        %v427 = vpop.xlane.xlu0 %426
        %v428 = vsel %vm307, %v424, 0.0
        %429 = vadd.xlane.f32.xlu0 %v428
        %v430 = vpop.xlane.xlu0 %429
        %v431 = vmul.f32 %v427, %v418
        %v432 = vmul.f32 %v430, %v418
        %v433 = vadd.f32 %v431, 1e-12
        %v434 = vadd.f32 %v432, 1e-12
        %v435 = vrsqrt.pop %v433
        %v436 = vrsqrt.pop %v434
        %v437 = vmul.f32 %v421, %v435
        %v438 = vmul.f32 %v422, %v436
        %v439 = vld [vmem:[%s3] sm:$0x1]
        %v441 = vlaneseq
        %v442 = vshrl.u32 %v441, 7
        %v443 = vsub.s32 0, %v442
        %v444 = vrot.slane %v439, %v443
        %v446 = vmul.f32 %v437, %v444
        %v447 = vmul.f32 %v438, %v444
        %v448 = vld [vmem:[%s4] sm:$0x1]
        %v450 = vlaneseq
        %v451 = vshrl.u32 %v450, 7
        %v452 = vsub.s32 0, %v451
        %v453 = vrot.slane %v448, %v452
        %v455 = vadd.f32 %v446, %v453
        %v456 = vadd.f32 %v447, %v453
        %v457 = vmax.f32 %v455, 0.0
        %v458 = vmax.f32 %v456, 0.0
        %v459 = vld [vmem:[%s5] sm:$0x1]
        %v460 = vld [vmem:[#allocation2] sm:$0x1]
        %462 = vset.pattern.permute.xlu0 0
        %463 = vperm.xlu0 %462, %v460
        %v464 = vpop.permute.xlu0 %463
        %v466 = vlaneseq
        %v467 = vshrl.u32 %v466, 7
        %v468 = vsub.s32 0, %v467
        %v469 = vrot.slane %v464, %v468
        %v471 = vsel %vm307, %v459, 0
        %v474 = vsel %vm307, %v457, 0
        %v477 = vsel %vm307, %v458, 0
        %479 = vmatprep.subr.mxu0 0.0
        %480 = vmatpush1.xpose.msra.mxu0 0.0
        %481 = vmatprep.subr.mxu0 0.0
        %482 = vmatpush1.xpose.msra.mxu0 0.0
        %483 = vmatprep.subr.mxu0 0.0
        %484 = vmatpush1.xpose.msra.mxu0 0.0
        %485 = vmatprep.subr.mxu0 0.0
        %486 = vmatpush1.xpose.msra.mxu0 0.0
        %487 = vmatprep.subr.mxu0 0.0
        %488 = vmatpush1.xpose.msra.mxu0 0.0
        %489 = vmatprep.subr.mxu0 0.0
        %490 = vmatpush1.xpose.msra.mxu0 0.0
        %491 = vmatprep.subr.mxu0 0.0
        %492 = vmatpush1.xpose.msra.mxu0 0.0
        %493 = vmatprep.subr.mxu0 0.0
        %494 = vmatpush1.xpose.msra.mxu0 0.0
        %495 = vmatprep.subr.mxu0 0.0
        %496 = vmatpush1.xpose.msra.mxu0 0.0
        %497 = vmatprep.subr.mxu0 0.0
        %498 = vmatpush1.xpose.msra.mxu0 0.0
        %499 = vmatprep.subr.mxu0 0.0
        %500 = vmatpush1.xpose.msra.mxu0 0.0
        %501 = vmatprep.subr.mxu0 0.0
        %502 = vmatpush1.xpose.msra.mxu0 0.0
        %503 = vmatprep.subr.mxu0 0.0
        %504 = vmatpush1.xpose.msra.mxu0 0.0
        %505 = vmatprep.subr.mxu0 0.0
        %506 = vmatpush1.xpose.msra.mxu0 0.0
        %507 = vmatprep.subr.mxu0 0.0
        %508 = vmatpush1.xpose.msra.mxu0 %v477
        %509 = vmatprep.subr.mxu0 0.0
        %510 = vmatpush1.xpose.msra.mxu0 %v474
        %511 = vmatprep.subr.mxu0 0.0
        %512 = vmatpush2.xpose.msra.mxu0 0.0
        %513 = vmatprep.subr.mxu0 0.0
        %514 = vmatpush2.xpose.msra.mxu0 0.0
        %515 = vmatprep.subr.mxu0 0.0
        %516 = vmatpush2.xpose.msra.mxu0 0.0
        %517 = vmatprep.subr.mxu0 0.0
        %518 = vmatpush2.xpose.msra.mxu0 0.0
        %519 = vmatprep.subr.mxu0 0.0
        %520 = vmatpush2.xpose.msra.mxu0 0.0
        %521 = vmatprep.subr.mxu0 0.0
        %522 = vmatpush2.xpose.msra.mxu0 0.0
        %523 = vmatprep.subr.mxu0 0.0
        %524 = vmatpush2.xpose.msra.mxu0 0.0
        %525 = vmatprep.subr.mxu0 0.0
        %526 = vmatpush2.xpose.msra.mxu0 0.0
        %527 = vmatprep.subr.mxu0 0.0
        %528 = vmatpush2.xpose.msra.mxu0 0.0
        %529 = vmatprep.subr.mxu0 0.0
        %530 = vmatpush2.xpose.msra.mxu0 0.0
        %531 = vmatprep.subr.mxu0 0.0
        %532 = vmatpush2.xpose.msra.mxu0 0.0
        %533 = vmatprep.subr.mxu0 0.0
        %534 = vmatpush2.xpose.msra.mxu0 0.0
        %535 = vmatprep.subr.mxu0 0.0
        %536 = vmatpush2.xpose.msra.mxu0 0.0
        %537 = vmatprep.subr.mxu0 0.0
        %538 = vmatpush2.xpose.msra.mxu0 0.0
        %539 = vmatprep.subr.mxu0 0.0
        %540 = vmatpush2.xpose.msra.mxu0 0.0
        %541 = vmatprep.subr.mxu0 0.0
        %542 = vmatpush2.xpose.msra.mxu0 0.0
        %543 = vmatprep.mubr.f32.mxu0 0.0
        %544 = vmatmul.mubr.f32.gmra.mxu0 %v471
        %v545 = vpop.f32.mrf.mxu0
        %v546 = vadd.f32 %v469, %v545
        %v547 = vpop.f32.mrf.mxu0
        %548 = vdwg.mxu0
        %v549 = vxor.u32 %v546, 2147483648
        %v550 = vmul.f32 %v549, 1.442695
        %v551 = vpow.pop %v550
        %v552 = vadd.f32 %v551, 1.0
        %v553 = vrcp.pop %v552
        %v554 = vmul.f32 1.0, %v553
        %vm555 = vcmask 122880
        %556 = vst.msk [vmem:[%s272] sm:$0x1] %vm555, %v554
        %s557 = sand.u32 %s183, 1
        %s558 = scalar_lea.sflag [#allocation4], %s557
        %s559 = sand.u32 %s183, 1
        %s560 = scalar_lea.vmem [#allocation3], %s559
        // Predicated region
        $region49: #{tpu_custom_call.1} parent=47 // pred_check
          %p561 = pneg %p193
        $region50: #{tpu_custom_call.1} parent=47 // pred_check_branch
          %563 = sbr.rel (%p561) target = $region52
        $region51: #{tpu_custom_call.1} parent=47 // pred_region
          %s565 = ssub.s32 16, 16
          %566 = vsyncadd %s558, %s565
          %s567 = smul.addr %s23, 16
          %s568 = scalar_lea.hbm %s7, %s567
          %s570 = sshll.u32 %s560, 4
          %s571 = int_to_ptr.vmem [resolvable:$true] %s570
          %573 = dma.vmem_to_hbm [thread:$0]  %s571, 16, %s568, %s558
        $region52: #{tpu_custom_call.1} parent=47 // pred_fallthru
          _
      $region48: #{tpu_custom_call.1} parent=5 // pred_fallthru
        _
      %p574 = scmp.le.s32.totalorder 2, %s18
      // Predicated region
      $region53: #{tpu_custom_call.1} parent=5 // pred_check
        %p575 = pneg %p574
      $region54: #{tpu_custom_call.1} parent=5 // pred_check_branch
        %577 = sbr.rel (%p575) target = $region56
      $region55: #{tpu_custom_call.1} parent=5 // pred_region
        %s578 = ssub.s32 %s18, 2
        // Predicated region
        $region57: #{tpu_custom_call.1} parent=55 // pred_check
          %p579 = pneg %p199
        $region58: #{tpu_custom_call.1} parent=55 // pred_check_branch
          %581 = sbr.rel (%p579) target = $region60
        $region59: #{tpu_custom_call.1} parent=55 // pred_region
          %s582 = sand.u32 %s184, 1
          %s583 = scalar_lea.sflag [#allocation4], %s582
          %s584 = sand.u32 %s184, 1
          %s585 = scalar_lea.vmem [#allocation3], %s584
          %586 = dma.done %s583, 16
        $region60: #{tpu_custom_call.1} parent=55 // pred_fallthru
          _
      $region56: #{tpu_custom_call.1} parent=5 // pred_fallthru
        _
    $region6: #{tpu_custom_call.1} parent=1 // loop_footer
      %s22 = sadd.s32 1, %s18
    $region7: #{tpu_custom_call.1} parent=1 // loop_footer_branch
      %17 = sbr.rel target = $region3
    $region8: #{tpu_custom_call.1} parent=1 // loop_exit
      _
    %587 = vsyncpa [#allocation4], 1
    %s588 = scalar_lea.sflag [#allocation4], 1
    %589 = vsyncpa %s588, 1

</llo_original>
